<compile_context>
chip_gen: v7x
topology: tpu7x:2x2x1
jax: 0.10.0
libtpu: 0.0.40
codegen_flags: <defaults>
</compile_context>

<pallas_src>
import functools

import jax
import jax.numpy as jnp
from jax.experimental import pallas as pl
from jax.experimental.pallas import tpu as pltpu

S_DEFAULT, B_DEFAULT, C_DEFAULT = 7, 2, 20
_N_CORES = 2          # leading "parallel" grid axis (2 TCs on v7x; harmless on v5e/v6e)
_TN_MAX = 8192        # ~1 MiB per f32 input block (32 x 8192) -> ~4 MiB double-buffered


def _round_up(x, m):
    return ((x + m - 1) // m) * m


def _cdiv(a, b):
    return (a + b - 1) // b


def _yolo_loss_kernel(pred_ref, targ_ref, out_ref, *, num_b, num_c):
    """pred_ref/targ_ref: [32, TN] blocks (channel rows, cell lanes).

    out_ref: [8, 128] per-core accumulator; row 0, lanes 0..3 hold the
    (coord, obj, noobj, class) partial sums for this core.
    """
    @pl.when(pl.program_id(1) == 0)
    def _():
        out_ref[...] = jnp.zeros_like(out_ref)

    # --- target rows (lane-dense [1, TN] / [4, TN]) -----------------------
    t_box = targ_ref[0:4, :]                         # x, y, w, h of target box
    tw = targ_ref[2:3, :]
    th = targ_ref[3:4, :]
    tconf = targ_ref[4:5, :]
    t_area = tw * th

    obj = tconf == 1.0                               # padded cells: tconf == 0
    noobj = tconf == 0.0                             # ... and pred == 0 -> adds 0

    # --- simplified IoU argmax over the B predictor boxes -----------------
    # Reference computes inter/(union+eps); for the argmax only the ordering
    # matters and union+eps > 0 for probability-valued boxes, so compare
    # cross products instead of dividing (keeps EUP free for the BCE logs).
    inters, dens = [], []
    for b in range(num_b):
        pw = pred_ref[b * 5 + 2:b * 5 + 3, :]
        ph = pred_ref[b * 5 + 3:b * 5 + 4, :]
        inter = jnp.minimum(pw, tw) * jnp.minimum(ph, th)
        den = pw * ph + t_area - inter + 1e-6
        inters.append(inter)
        dens.append(den)

    best_idx = jnp.zeros_like(tconf, dtype=jnp.int32)
    best_inter, best_den = inters[0], dens[0]
    for b in range(1, num_b):
        # strict > keeps the first index on ties (torch/jnp argmax behavior)
        better = inters[b] * best_den > best_inter * dens[b]
        best_idx = jnp.where(better, jnp.int32(b), best_idx)
        best_inter = jnp.where(better, inters[b], best_inter)
        best_den = jnp.where(better, dens[b], best_den)

    # --- per-box coordinate / objectness terms ----------------------------
    zero = jnp.zeros_like(tconf)
    coord_rows, obj_rows, noobj_rows = zero, zero, zero
    for b in range(num_b):
        pbox = pred_ref[b * 5:b * 5 + 4, :]                       # (4, TN)
        diff = pbox - t_box
        sq = jnp.sum(diff * diff, axis=0, keepdims=True)          # (1, TN)
        coord_rows = coord_rows + jnp.where(obj & (best_idx == b), sq, 0.0)

        pconf = pred_ref[b * 5 + 4:b * 5 + 5, :]
        cerr = (pconf - tconf) ** 2
        obj_rows = obj_rows + jnp.where(obj, cerr, 0.0)
        noobj_rows = noobj_rows + jnp.where(noobj, cerr, 0.0)

    # --- class BCE on a dense [C, TN] slab (full-lane EUP pushes) ---------
    pcls = pred_ref[num_b * 5:num_b * 5 + num_c, :]
    tcls = targ_ref[num_b * 5:num_b * 5 + num_c, :]
    logp = jnp.maximum(jnp.log(pcls), -100.0)                     # torch BCELoss clamp
    log1mp = jnp.maximum(jnp.log(1.0 - pcls), -100.0)
    bce = -(tcls * logp + (1.0 - tcls) * log1mp)
    cls_rows = jnp.where(obj, jnp.sum(bce, axis=0, keepdims=True), 0.0)

    # --- reduce this block and accumulate into row 0, lanes 0..3 ----------
    coord_s = jnp.sum(coord_rows)
    obj_s = jnp.sum(obj_rows)
    noobj_s = jnp.sum(noobj_rows)
    cls_s = jnp.sum(cls_rows)

    row = jax.lax.broadcasted_iota(jnp.int32, out_ref.shape, 0)
    lane = jax.lax.broadcasted_iota(jnp.int32, out_ref.shape, 1)
    r0 = row == 0
    partial = (jnp.where(r0 & (lane == 0), coord_s, 0.0)
               + jnp.where(r0 & (lane == 1), obj_s, 0.0)
               + jnp.where(r0 & (lane == 2), noobj_s, 0.0)
               + jnp.where(r0 & (lane == 3), cls_s, 0.0))
    out_ref[...] += partial


def yolo_loss(predictions, targets, *, S=S_DEFAULT, B=B_DEFAULT, C=C_DEFAULT,
              lambda_coord=1.0, lambda_noobj=1.0, lambda_obj=1.0,
              lambda_class=1.0):
    """predictions/targets: [batch, S, S, B*5 + C] -> (total_loss[1], dict)."""
    batch = predictions.shape[0]
    D = B * 5 + C
    N = batch * S * S

    tn = min(_TN_MAX, _round_up(max(_cdiv(N, _N_CORES), 1), 128))
    steps = _cdiv(N, _N_CORES * tn)
    n_pad = _N_CORES * steps * tn
    d_pad = _round_up(D, 8)                      # 30 -> 32 sublanes

    p2 = predictions.reshape(N, D).astype(jnp.float32)
    t2 = targets.reshape(N, D).astype(jnp.float32)
    p2 = jnp.pad(p2, ((0, n_pad - N), (0, d_pad - D)))
    t2 = jnp.pad(t2, ((0, n_pad - N), (0, d_pad - D)))
    pred_t = p2.T                                # [d_pad, n_pad]: channels x cells
    targ_t = t2.T

    kernel = functools.partial(_yolo_loss_kernel, num_b=B, num_c=C)
    in_spec = pl.BlockSpec((d_pad, tn), lambda c, i: (0, c * steps + i))
    sums = pl.pallas_call(
        kernel,
        out_shape=jax.ShapeDtypeStruct((_N_CORES * 8, 128), jnp.float32),
        grid=(_N_CORES, steps),
        in_specs=[in_spec, in_spec],
        out_specs=pl.BlockSpec((8, 128), lambda c, i: (c, 0)),
        compiler_params=pltpu.CompilerParams(
            dimension_semantics=("parallel", "arbitrary")),
    )(pred_t, targ_t)

    per_core = sums.reshape(_N_CORES, 8, 128)[:, 0, 0:4]   # (cores, 4)
    comps = jnp.sum(per_core, axis=0) / batch
    coord, obj, noobj, cls = (comps[0:1], comps[1:2], comps[2:3], comps[3:4])
    total = (lambda_coord * coord + lambda_obj * obj
             + lambda_noobj * noobj + lambda_class * cls)
    return total, {'coord_loss': coord, 'obj_loss': obj,
                   'noobj_loss': noobj, 'class_loss': cls}


def _yolo_loss_ref(predictions, targets, S=S_DEFAULT, B=B_DEFAULT, C=C_DEFAULT):
    """Pure-JAX reference (vectorized transcription of the torch module)."""
    batch = predictions.shape[0]
    D = B * 5 + C
    p = predictions.reshape(-1, D).astype(jnp.float32)
    t = targets.reshape(-1, D).astype(jnp.float32)
    tconf = t[:, 4]
    obj = tconf == 1.0
    noobj = tconf == 0.0
    tw, th = t[:, 2], t[:, 3]
    ious = []
    for b in range(B):
        pw, ph = p[:, b * 5 + 2], p[:, b * 5 + 3]
        inter = jnp.minimum(pw, tw) * jnp.minimum(ph, th)
        union = pw * ph + tw * th - inter
        ious.append(inter / (union + 1e-6))
    best = jnp.argmax(jnp.stack(ious, axis=1), axis=1)
    coord = 0.0
    objl = 0.0
    noobjl = 0.0
    for b in range(B):
        sq = jnp.sum((p[:, b * 5:b * 5 + 4] - t[:, 0:4]) ** 2, axis=1)
        coord += jnp.sum(jnp.where(obj & (best == b), sq, 0.0))
        cerr = (p[:, b * 5 + 4] - tconf) ** 2
        objl += jnp.sum(jnp.where(obj, cerr, 0.0))
        noobjl += jnp.sum(jnp.where(noobj, cerr, 0.0))
    pc, tc = p[:, B * 5:], t[:, B * 5:]
    bce = -(tc * jnp.maximum(jnp.log(pc), -100.0)
            + (1.0 - tc) * jnp.maximum(jnp.log(1.0 - pc), -100.0))
    cls = jnp.sum(jnp.where(obj, jnp.sum(bce, axis=1), 0.0))
    comps = jnp.array([coord, objl, noobjl, cls]) / batch
    return jnp.sum(comps), comps


if __name__ == "__main__":
    S, B, C = S_DEFAULT, B_DEFAULT, C_DEFAULT
    D = B * 5 + C
    batch = 2

    key = jax.random.PRNGKey(0)
    k1, k2, k3, k4 = jax.random.split(key, 4)

    # predictions must be valid probabilities (BCE): squash with sigmoid
    predictions = jax.nn.sigmoid(
        jax.random.normal(k1, (batch, S, S, D))).astype(jnp.float32)

    # targets: box coords in [0,1], confidence in {0,1}, one-hot classes
    t_box = jax.random.uniform(k2, (batch, S, S, 4), dtype=jnp.float32)
    t_conf = (jax.random.uniform(k3, (batch, S, S, 1)) > 0.5).astype(jnp.float32)
    t_cls = jax.nn.one_hot(jax.random.randint(k4, (batch, S, S), 0, C), C,
                           dtype=jnp.float32)
    targets = jnp.concatenate([t_box, t_conf, t_box, t_conf, t_cls], axis=-1)
    assert targets.shape == (batch, S, S, D)

    total, comps = yolo_loss(predictions, targets)
    jax.block_until_ready(total)

    ref_total, ref_comps = _yolo_loss_ref(predictions, targets)
    got = jnp.array([comps['coord_loss'][0], comps['obj_loss'][0],
                     comps['noobj_loss'][0], comps['class_loss'][0]])
    assert jnp.allclose(got, ref_comps, rtol=1e-4, atol=1e-4), (got, ref_comps)
    assert jnp.allclose(total[0], ref_total, rtol=1e-4, atol=1e-4)

    print("KERNEL_OK")
</pallas_src>

<mosaic_0001>
module attributes {stable_mosaic.version = 11 : i64} {
  func.func @_yolo_loss_kernel(%arg0: i32, %arg1: i32, %arg2: memref<32x128xf32, #tpu.memory_space<vmem>>, %arg3: memref<32x128xf32, #tpu.memory_space<vmem>>, %arg4: memref<8x128xf32, #tpu.memory_space<vmem>>) attributes {dimension_semantics = [#tpu.dimension_semantics<parallel>, #tpu.dimension_semantics<arbitrary>], iteration_bounds = array<i64: 2, 1>, scalar_prefetch = 0 : i64, scratch_operands = 0 : i64, tpu.core_type = #tpu.core_type<tc>, window_params = [{transform_indices = @transform_0, window_bounds = array<i64: 32, 128>}, {transform_indices = @transform_1, window_bounds = array<i64: 32, 128>}, {transform_indices = @transform_2, window_bounds = array<i64: 8, 128>}]} {
    %c0_i32 = arith.constant 0 : i32
    %0 = arith.cmpi eq, %arg1, %c0_i32 : i32
    %1 = arith.extui %0 : i1 to i32
    %c0_i32_0 = arith.constant 0 : i32
    %2 = arith.cmpi ne, %1, %c0_i32_0 : i32
    scf.if %2 {
      %cst_57 = arith.constant 0.000000e+00 : f32
      %150 = vector.broadcast %cst_57 : f32 to vector<8x128xf32>
      %c0_58 = arith.constant 0 : index
      %c0_59 = arith.constant 0 : index
      %151 = vector.load %arg4[%c0_58, %c0_59] : memref<8x128xf32, #tpu.memory_space<vmem>>, vector<8x128xf32>
      tpu.vector_store %arg4[%c0_58, %c0_59], %150 {strides = array<i32>} : memref<8x128xf32, #tpu.memory_space<vmem>>, vector<8x128xf32>,
    } else {
    }
    %c0 = arith.constant 0 : index
    %c0_1 = arith.constant 0 : index
    %3 = vector.load %arg3[%c0, %c0_1] : memref<32x128xf32, #tpu.memory_space<vmem>>, vector<4x128xf32>
    %c2 = arith.constant 2 : index
    %c0_2 = arith.constant 0 : index
    %4 = vector.load %arg3[%c2, %c0_2] : memref<32x128xf32, #tpu.memory_space<vmem>>, vector<1x128xf32>
    %c3 = arith.constant 3 : index
    %c0_3 = arith.constant 0 : index
    %5 = vector.load %arg3[%c3, %c0_3] : memref<32x128xf32, #tpu.memory_space<vmem>>, vector<1x128xf32>
    %c4 = arith.constant 4 : index
    %c0_4 = arith.constant 0 : index
    %6 = vector.load %arg3[%c4, %c0_4] : memref<32x128xf32, #tpu.memory_space<vmem>>, vector<1x128xf32>
    %7 = arith.mulf %4, %5 : vector<1x128xf32>
    %cst = arith.constant 1.000000e+00 : f32
    %8 = vector.broadcast %cst : f32 to vector<1x128xf32>
    %9 = arith.cmpf oeq, %6, %8 : vector<1x128xf32>
    %cst_5 = arith.constant 0.000000e+00 : f32
    %10 = vector.broadcast %cst_5 : f32 to vector<1x128xf32>
    %11 = arith.cmpf oeq, %6, %10 : vector<1x128xf32>
    %c2_6 = arith.constant 2 : index
    %c0_7 = arith.constant 0 : index
    %12 = vector.load %arg2[%c2_6, %c0_7] : memref<32x128xf32, #tpu.memory_space<vmem>>, vector<1x128xf32>
    %c3_8 = arith.constant 3 : index
    %c0_9 = arith.constant 0 : index
    %13 = vector.load %arg2[%c3_8, %c0_9] : memref<32x128xf32, #tpu.memory_space<vmem>>, vector<1x128xf32>
    %14 = arith.minimumf %12, %4 : vector<1x128xf32>
    %15 = arith.minimumf %13, %5 : vector<1x128xf32>
    %16 = arith.mulf %14, %15 : vector<1x128xf32>
    %17 = arith.mulf %12, %13 : vector<1x128xf32>
    %18 = arith.addf %17, %7 : vector<1x128xf32>
    %19 = arith.subf %18, %16 : vector<1x128xf32>
    %cst_10 = arith.constant 9.99999997E-7 : f32
    %20 = vector.broadcast %cst_10 : f32 to vector<1x128xf32>
    %21 = arith.addf %19, %20 : vector<1x128xf32>
    %c7 = arith.constant 7 : index
    %c0_11 = arith.constant 0 : index
    %22 = vector.load %arg2[%c7, %c0_11] : memref<32x128xf32, #tpu.memory_space<vmem>>, vector<1x128xf32>
    %c8 = arith.constant 8 : index
    %c0_12 = arith.constant 0 : index
    %23 = vector.load %arg2[%c8, %c0_12] : memref<32x128xf32, #tpu.memory_space<vmem>>, vector<1x128xf32>
    %24 = arith.minimumf %22, %4 : vector<1x128xf32>
    %25 = arith.minimumf %23, %5 : vector<1x128xf32>
    %26 = arith.mulf %24, %25 : vector<1x128xf32>
    %27 = arith.mulf %22, %23 : vector<1x128xf32>
    %28 = arith.addf %27, %7 : vector<1x128xf32>
    %29 = arith.subf %28, %26 : vector<1x128xf32>
    %cst_13 = arith.constant 9.99999997E-7 : f32
    %30 = vector.broadcast %cst_13 : f32 to vector<1x128xf32>
    %31 = arith.addf %29, %30 : vector<1x128xf32>
    %c0_i32_14 = arith.constant 0 : i32
    %32 = vector.broadcast %c0_i32_14 : i32 to vector<1x128xi32>
    %33 = arith.mulf %26, %21 : vector<1x128xf32>
    %34 = arith.mulf %16, %31 : vector<1x128xf32>
    %35 = arith.cmpf ogt, %33, %34 : vector<1x128xf32>
    %c1_i32 = arith.constant 1 : i32
    %36 = vector.broadcast %c1_i32 : i32 to vector<1x128xi32>
    %37 = arith.select %35, %36, %32 : vector<1x128xi1>, vector<1x128xi32>
    %cst_15 = arith.constant 0.000000e+00 : f32
    %38 = vector.broadcast %cst_15 : f32 to vector<1x128xf32>
    %c0_16 = arith.constant 0 : index
    %c0_17 = arith.constant 0 : index
    %39 = vector.load %arg2[%c0_16, %c0_17] : memref<32x128xf32, #tpu.memory_space<vmem>>, vector<4x128xf32>
    %40 = arith.subf %39, %3 : vector<4x128xf32>
    %41 = arith.mulf %40, %40 : vector<4x128xf32>
    %cst_18 = arith.constant dense<0.000000e+00> : vector<128xf32>
    %42 = vector.multi_reduction <add>, %41, %cst_18 [0] : vector<4x128xf32> to vector<128xf32>
    %43 = vector.shape_cast %42 : vector<128xf32> to vector<1x128xf32>
    %c0_i32_19 = arith.constant 0 : i32
    %44 = vector.broadcast %c0_i32_19 : i32 to vector<1x128xi32>
    %45 = arith.cmpi eq, %37, %44 : vector<1x128xi32>
    %46 = arith.andi %9, %45 : vector<1x128xi1>
    %cst_20 = arith.constant 0.000000e+00 : f32
    %47 = vector.broadcast %cst_20 : f32 to vector<1x128xf32>
    %48 = arith.select %46, %43, %47 : vector<1x128xi1>, vector<1x128xf32>
    %49 = arith.addf %38, %48 : vector<1x128xf32>
    %c4_21 = arith.constant 4 : index
    %c0_22 = arith.constant 0 : index
    %50 = vector.load %arg2[%c4_21, %c0_22] : memref<32x128xf32, #tpu.memory_space<vmem>>, vector<1x128xf32>
    %51 = arith.subf %50, %6 : vector<1x128xf32>
    %52 = arith.mulf %51, %51 : vector<1x128xf32>
    %cst_23 = arith.constant 0.000000e+00 : f32
    %53 = vector.broadcast %cst_23 : f32 to vector<1x128xf32>
    %54 = arith.select %9, %52, %53 : vector<1x128xi1>, vector<1x128xf32>
    %55 = arith.addf %38, %54 : vector<1x128xf32>
    %cst_24 = arith.constant 0.000000e+00 : f32
    %56 = vector.broadcast %cst_24 : f32 to vector<1x128xf32>
    %57 = arith.select %11, %52, %56 : vector<1x128xi1>, vector<1x128xf32>
    %58 = arith.addf %38, %57 : vector<1x128xf32>
    %c5 = arith.constant 5 : index
    %c0_25 = arith.constant 0 : index
    %59 = vector.load %arg2[%c5, %c0_25] : memref<32x128xf32, #tpu.memory_space<vmem>>, vector<4x128xf32>
    %60 = arith.subf %59, %3 : vector<4x128xf32>
    %61 = arith.mulf %60, %60 : vector<4x128xf32>
    %cst_26 = arith.constant dense<0.000000e+00> : vector<128xf32>
    %62 = vector.multi_reduction <add>, %61, %cst_26 [0] : vector<4x128xf32> to vector<128xf32>
    %63 = vector.shape_cast %62 : vector<128xf32> to vector<1x128xf32>
    %c1_i32_27 = arith.constant 1 : i32
    %64 = vector.broadcast %c1_i32_27 : i32 to vector<1x128xi32>
    %65 = arith.cmpi eq, %37, %64 : vector<1x128xi32>
    %66 = arith.andi %9, %65 : vector<1x128xi1>
    %cst_28 = arith.constant 0.000000e+00 : f32
    %67 = vector.broadcast %cst_28 : f32 to vector<1x128xf32>
    %68 = arith.select %66, %63, %67 : vector<1x128xi1>, vector<1x128xf32>
    %69 = arith.addf %49, %68 : vector<1x128xf32>
    %c9 = arith.constant 9 : index
    %c0_29 = arith.constant 0 : index
    %70 = vector.load %arg2[%c9, %c0_29] : memref<32x128xf32, #tpu.memory_space<vmem>>, vector<1x128xf32>
    %71 = arith.subf %70, %6 : vector<1x128xf32>
    %72 = arith.mulf %71, %71 : vector<1x128xf32>
    %cst_30 = arith.constant 0.000000e+00 : f32
    %73 = vector.broadcast %cst_30 : f32 to vector<1x128xf32>
    %74 = arith.select %9, %72, %73 : vector<1x128xi1>, vector<1x128xf32>
    %75 = arith.addf %55, %74 : vector<1x128xf32>
    %cst_31 = arith.constant 0.000000e+00 : f32
    %76 = vector.broadcast %cst_31 : f32 to vector<1x128xf32>
    %77 = arith.select %11, %72, %76 : vector<1x128xi1>, vector<1x128xf32>
    %78 = arith.addf %58, %77 : vector<1x128xf32>
    %c10 = arith.constant 10 : index
    %c0_32 = arith.constant 0 : index
    %79 = vector.load %arg2[%c10, %c0_32] : memref<32x128xf32, #tpu.memory_space<vmem>>, vector<20x128xf32>
    %c10_33 = arith.constant 10 : index
    %c0_34 = arith.constant 0 : index
    %80 = vector.load %arg3[%c10_33, %c0_34] : memref<32x128xf32, #tpu.memory_space<vmem>>, vector<20x128xf32>
    %81 = math.log %79 : vector<20x128xf32>
    %cst_35 = arith.constant -1.000000e+02 : f32
    %82 = vector.broadcast %cst_35 : f32 to vector<20x128xf32>
    %83 = arith.maximumf %81, %82 : vector<20x128xf32>
    %cst_36 = arith.constant 1.000000e+00 : f32
    %84 = vector.broadcast %cst_36 : f32 to vector<20x128xf32>
    %85 = arith.subf %84, %79 : vector<20x128xf32>
    %86 = math.log %85 : vector<20x128xf32>
    %cst_37 = arith.constant -1.000000e+02 : f32
    %87 = vector.broadcast %cst_37 : f32 to vector<20x128xf32>
    %88 = arith.maximumf %86, %87 : vector<20x128xf32>
    %89 = arith.mulf %80, %83 : vector<20x128xf32>
    %cst_38 = arith.constant 1.000000e+00 : f32
    %90 = vector.broadcast %cst_38 : f32 to vector<20x128xf32>
    %91 = arith.subf %90, %80 : vector<20x128xf32>
    %92 = arith.mulf %91, %88 : vector<20x128xf32>
    %93 = arith.addf %89, %92 : vector<20x128xf32>
    %cst_39 = arith.constant 0.000000e+00 : f32
    %94 = vector.broadcast %cst_39 : f32 to vector<20x128xf32>
    %95 = arith.subf %94, %93 : vector<20x128xf32>
    %cst_40 = arith.constant dense<0.000000e+00> : vector<128xf32>
    %96 = vector.multi_reduction <add>, %95, %cst_40 [0] : vector<20x128xf32> to vector<128xf32>
    %97 = vector.shape_cast %96 : vector<128xf32> to vector<1x128xf32>
    %cst_41 = arith.constant 0.000000e+00 : f32
    %98 = vector.broadcast %cst_41 : f32 to vector<1x128xf32>
    %99 = arith.select %9, %97, %98 : vector<1x128xi1>, vector<1x128xf32>
    %100 = vector.shape_cast %69 : vector<1x128xf32> to vector<1x1x128xf32>
    %cst_42 = arith.constant dense<0.000000e+00> : vector<1xf32>
    %101 = vector.multi_reduction <add>, %100, %cst_42 [1, 2] : vector<1x1x128xf32> to vector<1xf32>
    %102 = vector.shape_cast %101 : vector<1xf32> to vector<1x1x1xf32>
    %103 = vector.extract %102[0, 0, 0] : f32 from vector<1x1x1xf32>
    %104 = vector.shape_cast %75 : vector<1x128xf32> to vector<1x1x128xf32>
    %cst_43 = arith.constant dense<0.000000e+00> : vector<1xf32>
    %105 = vector.multi_reduction <add>, %104, %cst_43 [1, 2] : vector<1x1x128xf32> to vector<1xf32>
    %106 = vector.shape_cast %105 : vector<1xf32> to vector<1x1x1xf32>
    %107 = vector.extract %106[0, 0, 0] : f32 from vector<1x1x1xf32>
    %108 = vector.shape_cast %78 : vector<1x128xf32> to vector<1x1x128xf32>
    %cst_44 = arith.constant dense<0.000000e+00> : vector<1xf32>
    %109 = vector.multi_reduction <add>, %108, %cst_44 [1, 2] : vector<1x1x128xf32> to vector<1xf32>
    %110 = vector.shape_cast %109 : vector<1xf32> to vector<1x1x1xf32>
    %111 = vector.extract %110[0, 0, 0] : f32 from vector<1x1x1xf32>
    %112 = vector.shape_cast %99 : vector<1x128xf32> to vector<1x1x128xf32>
    %cst_45 = arith.constant dense<0.000000e+00> : vector<1xf32>
    %113 = vector.multi_reduction <add>, %112, %cst_45 [1, 2] : vector<1x1x128xf32> to vector<1xf32>
    %114 = vector.shape_cast %113 : vector<1xf32> to vector<1x1x1xf32>
    %115 = vector.extract %114[0, 0, 0] : f32 from vector<1x1x1xf32>
    %116 = tpu.iota {dimensions = array<i32: 0>} : vector<8x128xi32>
    %117 = tpu.iota {dimensions = array<i32: 1>} : vector<8x128xi32>
    %c0_i32_46 = arith.constant 0 : i32
    %118 = vector.broadcast %c0_i32_46 : i32 to vector<8x128xi32>
    %119 = arith.cmpi eq, %116, %118 : vector<8x128xi32>
    %c0_i32_47 = arith.constant 0 : i32
    %120 = vector.broadcast %c0_i32_47 : i32 to vector<8x128xi32>
    %121 = arith.cmpi eq, %117, %120 : vector<8x128xi32>
    %122 = arith.andi %119, %121 : vector<8x128xi1>
    %cst_48 = arith.constant 0.000000e+00 : f32
    %123 = vector.broadcast %103 : f32 to vector<8x128xf32>
    %124 = vector.broadcast %cst_48 : f32 to vector<8x128xf32>
    %125 = arith.select %122, %123, %124 : vector<8x128xi1>, vector<8x128xf32>
    %c1_i32_49 = arith.constant 1 : i32
    %126 = vector.broadcast %c1_i32_49 : i32 to vector<8x128xi32>
    %127 = arith.cmpi eq, %117, %126 : vector<8x128xi32>
    %128 = arith.andi %119, %127 : vector<8x128xi1>
    %cst_50 = arith.constant 0.000000e+00 : f32
    %129 = vector.broadcast %107 : f32 to vector<8x128xf32>
    %130 = vector.broadcast %cst_50 : f32 to vector<8x128xf32>
    %131 = arith.select %128, %129, %130 : vector<8x128xi1>, vector<8x128xf32>
    %132 = arith.addf %125, %131 : vector<8x128xf32>
    %c2_i32 = arith.constant 2 : i32
    %133 = vector.broadcast %c2_i32 : i32 to vector<8x128xi32>
    %134 = arith.cmpi eq, %117, %133 : vector<8x128xi32>
    %135 = arith.andi %119, %134 : vector<8x128xi1>
    %cst_51 = arith.constant 0.000000e+00 : f32
    %136 = vector.broadcast %111 : f32 to vector<8x128xf32>
    %137 = vector.broadcast %cst_51 : f32 to vector<8x128xf32>
    %138 = arith.select %135, %136, %137 : vector<8x128xi1>, vector<8x128xf32>
    %139 = arith.addf %132, %138 : vector<8x128xf32>
    %c3_i32 = arith.constant 3 : i32
    %140 = vector.broadcast %c3_i32 : i32 to vector<8x128xi32>
    %141 = arith.cmpi eq, %117, %140 : vector<8x128xi32>
    %142 = arith.andi %119, %141 : vector<8x128xi1>
    %cst_52 = arith.constant 0.000000e+00 : f32
    %143 = vector.broadcast %115 : f32 to vector<8x128xf32>
    %144 = vector.broadcast %cst_52 : f32 to vector<8x128xf32>
    %145 = arith.select %142, %143, %144 : vector<8x128xi1>, vector<8x128xf32>
    %146 = arith.addf %139, %145 : vector<8x128xf32>
    %c0_53 = arith.constant 0 : index
    %c0_54 = arith.constant 0 : index
    %147 = vector.load %arg4[%c0_53, %c0_54] : memref<8x128xf32, #tpu.memory_space<vmem>>, vector<8x128xf32>
    %148 = arith.addf %147, %146 : vector<8x128xf32>
    %c0_55 = arith.constant 0 : index
    %c0_56 = arith.constant 0 : index
    %149 = vector.load %arg4[%c0_55, %c0_56] : memref<8x128xf32, #tpu.memory_space<vmem>>, vector<8x128xf32>
    tpu.vector_store %arg4[%c0_55, %c0_56], %148 {strides = array<i32>} : memref<8x128xf32, #tpu.memory_space<vmem>>, vector<8x128xf32>,
    return
  }
  func.func @transform_0(%arg0: i32, %arg1: i32) -> (i32, i32) {
    %c1_i32 = arith.constant 1 : i32
    %0 = arith.muli %arg0, %c1_i32 : i32
    %1 = arith.addi %0, %arg1 : i32
    %c0_i32 = arith.constant 0 : i32
    %c0_i32_0 = arith.constant 0 : i32
    return %c0_i32, %1 : i32, i32
  }
  func.func @transform_1(%arg0: i32, %arg1: i32) -> (i32, i32) {
    %c1_i32 = arith.constant 1 : i32
    %0 = arith.muli %arg0, %c1_i32 : i32
    %1 = arith.addi %0, %arg1 : i32
    %c0_i32 = arith.constant 0 : i32
    %c0_i32_0 = arith.constant 0 : i32
    return %c0_i32, %1 : i32, i32
  }
  func.func @transform_2(%arg0: i32, %arg1: i32) -> (i32, i32) {
    %c0_i32 = arith.constant 0 : i32
    %c0_i32_0 = arith.constant 0 : i32
    return %arg0, %c0_i32 : i32, i32
  }
}

</mosaic_0001>

<llo_original>
// kernel: tpu_custom_call.1
$region0: #{tpu_custom_call.1}
  #allocation0 [shape = 'u32[]', space=smem, size = 0x4, offset = 0x4, fixed_abs, tag = 'smem constant byte address 0x4 - core index']
  #allocation1 [shape = 'u32[144,128]{1,0:T(1,128)}', space=vmem, size = 0x12000, scoped, tag = 'internal scratch']
  %s0 = inlined_call_operand.hbm [shape: f32[32,256], index: 0, kind: input, shape index: {}]
  %s1 = inlined_call_operand.hbm [shape: f32[32,256], index: 1, kind: input, shape index: {}]
  %s2 = inlined_call_operand.hbm [shape: f32[16,128], index: 2, kind: output, shape index: {}]
  %s3 = sld [smem:[#allocation0]]
  $region53: #{tpu_custom_call.1} parent=0
    _
  %s5 = ssub.s32 1, %s3
  %s6 = scalar_select 0, %s5, %s3
  $region1: #{tpu_custom_call.1} parent=0
    #allocation2 [shape = 'u8[32768]{0}', space=vmem, size = 0x8000, scoped, tag = 'input window, operand 0']
    #allocation3 [shape = 's32[2]{0}', space=sflag, size = 0x8, scoped, tag = 'scoped memory for tpu_custom_call.1']
    #allocation4 [shape = 's32[2]{0}', space=sflag, size = 0x8, scoped, tag = 'scoped memory for tpu_custom_call.1']
    #allocation5 [shape = 'u8[32768]{0}', space=vmem, size = 0x8000, scoped, tag = 'input window, operand 1']
    #allocation6 [shape = 's32[2]{0}', space=sflag, size = 0x8, scoped, tag = 'scoped memory for tpu_custom_call.1']
    #allocation7 [shape = 'u8[8192]{0}', space=vmem, size = 0x2000, scoped, tag = 'output window, operand 0']
    %7 = vsyncpa [#allocation3], 0
    %s8 = scalar_lea.sflag [#allocation3], 1
    %9 = vsyncpa %s8, 0
    %10 = vsyncpa [#allocation6], 0
    %s11 = scalar_lea.sflag [#allocation6], 1
    %12 = vsyncpa %s11, 0
    %13 = vsyncpa [#allocation4], 0
    %s14 = scalar_lea.sflag [#allocation4], 1
    %15 = vsyncpa %s14, 0
    loop: start=0, step=1, limit=4
    $region2: #{tpu_custom_call.1} parent=1 // loop_pre_header
      _
    $region3: #{tpu_custom_call.1} parent=1 // loop_header
      %s17 = sphi 0, %s21
      %p18 = scmp.ge.s32.totalorder %s17, 4
      %s24 = sphi 0, %s36
      %s25 = sphi 0, %s32
      %s26 = sphi 0, %s24
      %s27 = sphi 0, %s25
      %s28 = sphi 0, %s26
      %s29 = sphi 0, %s27
      %s41 = sphi 0, %s43
      %s44 = sphi 0, %s41
      %s45 = sphi 0, %s44
      %s61 = sphi 0, %s45
      %s69 = sphi 0, %s71
      %s72 = sphi 0, %s69
      %s73 = sphi 0, %s72
      %s89 = sphi 0, %s73
      %s95 = sphi 0, %s97
      %s98 = sphi 0, %s95
      %s99 = sphi 0, %s98
      %s115 = sphi 0, %s99
    $region4: #{tpu_custom_call.1} parent=1 // loop_header_branch
      %20 = sbr.rel (%p18) target = $region8
    $region5: #{tpu_custom_call.1} parent=1 // loop_body
      %s22 = ssub.s32 %s17, 1
      %s23 = ssub.s32 %s17, 2
      %s30 = sadd.s32 1, %s25
      %p31 = scmp.ge.s32.totalorder %s30, 1
      %s32 = scalar_select %p31, 0, %s30
      %s33 = sadd.s32 1, %s24
      %s34 = scalar_select %p31, %s33, %s24
      %p35 = scmp.ge.s32.totalorder %s34, 2
      %s36 = scalar_select %p35, 0, %s34
      %s37 = sadd.s32 %s24, %s25
      %s38 = sadd.s32 %s36, %s32
      %s39 = ssub.s32 %s37, %s38
      %p40 = scmp.eq.s32.totalorder %s39, 0
      %s42 = sadd.s32 %s41, 1
      %s43 = scalar_select %p40, %s41, %s42
      %p46 = pneg %p40
      %p47 = scmp.eq.s32.totalorder %s17, 1
      %p48 = por %p46, %p47
      %p49 = scmp.ne.s32.totalorder %s41, %s44
      %p50 = scmp.eq.s32.totalorder %s17, 0
      %p51 = por %p49, %p50
      %p52 = scmp.ne.s32.totalorder %s41, %s44
      %p53 = scmp.eq.s32.totalorder %s22, 1
      %p54 = por %p52, %p53
      %p55 = scmp.ne.s32.totalorder %s44, %s45
      %p56 = scmp.eq.s32.totalorder %s22, 0
      %p57 = por %p55, %p56
      %p58 = scmp.ne.s32.totalorder %s44, %s45
      %p59 = scmp.eq.s32.totalorder %s23, 1
      %p60 = por %p58, %p59
      %p62 = scmp.ne.s32.totalorder %s45, %s61
      %p63 = scmp.eq.s32.totalorder %s23, 0
      %p64 = por %p62, %p63
      %s65 = sadd.s32 %s24, %s25
      %s66 = sadd.s32 %s36, %s32
      %s67 = ssub.s32 %s65, %s66
      %p68 = scmp.eq.s32.totalorder %s67, 0
      %s70 = sadd.s32 %s69, 1
      %s71 = scalar_select %p68, %s69, %s70
      %p74 = pneg %p68
      %p75 = scmp.eq.s32.totalorder %s17, 1
      %p76 = por %p74, %p75
      %p77 = scmp.ne.s32.totalorder %s69, %s72
      %p78 = scmp.eq.s32.totalorder %s17, 0
      %p79 = por %p77, %p78
      %p80 = scmp.ne.s32.totalorder %s69, %s72
      %p81 = scmp.eq.s32.totalorder %s22, 1
      %p82 = por %p80, %p81
      %p83 = scmp.ne.s32.totalorder %s72, %s73
      %p84 = scmp.eq.s32.totalorder %s22, 0
      %p85 = por %p83, %p84
      %p86 = scmp.ne.s32.totalorder %s72, %s73
      %p87 = scmp.eq.s32.totalorder %s23, 1
      %p88 = por %p86, %p87
      %p90 = scmp.ne.s32.totalorder %s73, %s89
      %p91 = scmp.eq.s32.totalorder %s23, 0
      %p92 = por %p90, %p91
      %s93 = ssub.s32 %s24, %s36
      %p94 = scmp.eq.s32.totalorder %s93, 0
      %s96 = sadd.s32 %s95, 1
      %s97 = scalar_select %p94, %s95, %s96
      %p100 = pneg %p94
      %p101 = scmp.eq.s32.totalorder %s17, 1
      %p102 = por %p100, %p101
      %p103 = scmp.ne.s32.totalorder %s95, %s98
      %p104 = scmp.eq.s32.totalorder %s17, 0
      %p105 = por %p103, %p104
      %p106 = scmp.ne.s32.totalorder %s95, %s98
      %p107 = scmp.eq.s32.totalorder %s22, 1
      %p108 = por %p106, %p107
      %p109 = scmp.ne.s32.totalorder %s98, %s99
      %p110 = scmp.eq.s32.totalorder %s22, 0
      %p111 = por %p109, %p110
      %p112 = scmp.ne.s32.totalorder %s98, %s99
      %p113 = scmp.eq.s32.totalorder %s23, 1
      %p114 = por %p112, %p113
      %p116 = scmp.ne.s32.totalorder %s99, %s115
      %p117 = scmp.eq.s32.totalorder %s23, 0
      %p118 = por %p116, %p117
      %p119 = scmp.le.s32.totalorder 1, %s17
      %p120 = scmp.lt.s32.totalorder %s17, 3
      %p121 = pnand %p119, %p120
      %p122 = pneg %p121
      // Predicated region
      $region9: #{tpu_custom_call.1} parent=5 // pred_check
        _
      $region10: #{tpu_custom_call.1} parent=5 // pred_check_branch
        %124 = sbr.rel (%p121) target = $region12
      $region11: #{tpu_custom_call.1} parent=5 // pred_region
        %s125 = ssub.s32 %s17, 1
      $region12: #{tpu_custom_call.1} parent=5 // pred_fallthru
        _
      %p126 = scmp.lt.s32.totalorder %s17, 2
      // Predicated region
      $region13: #{tpu_custom_call.1} parent=5 // pred_check
        %p127 = pneg %p126
      $region14: #{tpu_custom_call.1} parent=5 // pred_check_branch
        %129 = sbr.rel (%p127) target = $region16
      $region15: #{tpu_custom_call.1} parent=5 // pred_region
        // Predicated region
        $region17: #{tpu_custom_call.1} parent=15 // pred_check
          %p130 = pneg %p51
        $region18: #{tpu_custom_call.1} parent=15 // pred_check_branch
          %132 = sbr.rel (%p130) target = $region20
        $region19: #{tpu_custom_call.1} parent=15 // pred_region
          %s133 = sand.u32 %s41, 1
          %s134 = scalar_lea.sflag [#allocation3], %s133
          %s135 = sand.u32 %s41, 1
          %s136 = smul.addr %s135, 32
          %s137 = scalar_lea.vmem [#allocation2], %s136
          %s138 = sadd.s32 %s24, %s25
          %s140 = ssub.s32 512, 512
          %141 = vsyncadd %s134, %s140
          %s142 = smul.addr %s138, 128
          %s143 = scalar_lea.hbm %s0, %s142
          %s144 = sshll.u32 %s137, 4
          %s145 = int_to_ptr.vmem [resolvable:$true] %s144
          %150 = dma.hbm_to_vmem [thread:$0]  %s143, 512, %s145, %s134, 256, 128, 8
        $region20: #{tpu_custom_call.1} parent=15 // pred_fallthru
          _
        // Predicated region
        $region21: #{tpu_custom_call.1} parent=15 // pred_check
          %p151 = pneg %p79
        $region22: #{tpu_custom_call.1} parent=15 // pred_check_branch
          %153 = sbr.rel (%p151) target = $region24
        $region23: #{tpu_custom_call.1} parent=15 // pred_region
          %s154 = sand.u32 %s69, 1
          %s155 = scalar_lea.sflag [#allocation6], %s154
          %s156 = sand.u32 %s69, 1
          %s157 = smul.addr %s156, 32
          %s158 = scalar_lea.vmem [#allocation5], %s157
          %s159 = sadd.s32 %s24, %s25
          %s161 = ssub.s32 512, 512
          %162 = vsyncadd %s155, %s161
          %s163 = smul.addr %s159, 128
          %s164 = scalar_lea.hbm %s1, %s163
          %s165 = sshll.u32 %s158, 4
          %s166 = int_to_ptr.vmem [resolvable:$true] %s165
          %171 = dma.hbm_to_vmem [thread:$0]  %s164, 512, %s166, %s155, 256, 128, 8
        $region24: #{tpu_custom_call.1} parent=15 // pred_fallthru
          _
      $region16: #{tpu_custom_call.1} parent=5 // pred_fallthru
        _
      %p172 = scmp.le.s32.totalorder 1, %s17
      %p173 = scmp.lt.s32.totalorder %s17, 3
      %p174 = pnand %p172, %p173
      %p175 = pneg %p174
      // Predicated region
      $region25: #{tpu_custom_call.1} parent=5 // pred_check
        _
      $region26: #{tpu_custom_call.1} parent=5 // pred_check_branch
        %177 = sbr.rel (%p174) target = $region28
      $region27: #{tpu_custom_call.1} parent=5 // pred_region
        %s178 = ssub.s32 %s17, 1
        %s179 = sand.u32 %s44, 1
        %s180 = scalar_lea.sflag [#allocation3], %s179
        %s181 = sand.u32 %s44, 1
        %s182 = smul.addr %s181, 32
        %s183 = scalar_lea.vmem [#allocation2], %s182
        // Predicated region
        $region29: #{tpu_custom_call.1} parent=27 // pred_check
          %p184 = pneg %p57
        $region30: #{tpu_custom_call.1} parent=27 // pred_check_branch
          %186 = sbr.rel (%p184) target = $region32
        $region31: #{tpu_custom_call.1} parent=27 // pred_region
          %187 = dma.done %s180, 512
        $region32: #{tpu_custom_call.1} parent=27 // pred_fallthru
          _
        %s188 = sand.u32 %s72, 1
        %s189 = scalar_lea.sflag [#allocation6], %s188
        %s190 = sand.u32 %s72, 1
        %s191 = smul.addr %s190, 32
        %s192 = scalar_lea.vmem [#allocation5], %s191
        // Predicated region
        $region33: #{tpu_custom_call.1} parent=27 // pred_check
          %p193 = pneg %p85
        $region34: #{tpu_custom_call.1} parent=27 // pred_check_branch
          %195 = sbr.rel (%p193) target = $region36
        $region35: #{tpu_custom_call.1} parent=27 // pred_region
          %196 = dma.done %s189, 512
        $region36: #{tpu_custom_call.1} parent=27 // pred_fallthru
          _
        %s197 = sand.u32 %s44, 1
        %s198 = scalar_lea.sflag [#allocation3], %s197
        %s199 = sand.u32 %s44, 1
        %s200 = smul.addr %s199, 32
        %s201 = scalar_lea.vmem [#allocation2], %s200
        %p202 = pneg %p57
        %p203 = pneg %p54
        %s204 = sand.u32 %s72, 1
        %s205 = scalar_lea.sflag [#allocation6], %s204
        %s206 = sand.u32 %s72, 1
        %s207 = smul.addr %s206, 32
        %s208 = scalar_lea.vmem [#allocation5], %s207
        %p209 = pneg %p85
        %p210 = pneg %p82
        %p211 = pneg %p111
        %p212 = pneg %p108
        %s213 = sand.u32 %s98, 1
        %s214 = scalar_lea.sflag [#allocation4], %s213
        %s215 = sand.u32 %s98, 1
        %s216 = smul.addr %s215, 8
        %s217 = scalar_lea.vmem [#allocation7], %s216
        %s218 = sadd.s32 %s26, %s27
        %s219 = sadd.s32 %s26, %s27
        %p220 = scmp.eq.s32.totalorder %s27, 0
        // Predicated region
        $region37: #{tpu_custom_call.1} parent=27 // pred_check
          %p221 = pneg %p220
        $region38: #{tpu_custom_call.1} parent=27 // pred_check_branch
          %223 = sbr.rel (%p221) target = $region40
        $region39: #{tpu_custom_call.1} parent=27 // pred_region
          %224 = vst [vmem:[%s217] sm:$0xff] 0.0
        $region40: #{tpu_custom_call.1} parent=27 // pred_fallthru
          _
        %v225 = vld [vmem:[%s192] sm:$0xf]
        %v226 = vld [vmem:[%s192 + $0x2] sm:$0x1]
        %v227 = vld [vmem:[%s192 + $0x3] sm:$0x1]
        %v228 = vld [vmem:[%s192 + $0x4] sm:$0x1]
        %v229 = vmul.f32 %v226, %v227
        %vm230 = vcmp.eq.f32.partialorder %v228, 1.0
        %vm231 = vcmp.eq.f32.partialorder %v228, 0.0
        %v232 = vld [vmem:[%s183 + $0x2] sm:$0x1]
        %v233 = vld [vmem:[%s183 + $0x3] sm:$0x1]
        %v234 = vmin.f32 %v232, %v226
        %v235 = vmin.f32 %v233, %v227
        %v236 = vmul.f32 %v234, %v235
        %v237 = vmul.f32 %v232, %v233
        %v238 = vadd.f32 %v237, %v229
        %v239 = vsub.f32 %v238, %v236
        %v240 = vadd.f32 %v239, 1e-06
        %v241 = vld [vmem:[%s183 + $0x7] sm:$0x1]
        %v242 = vld [vmem:[%s183 + $0x8] sm:$0x1]
        %v243 = vmin.f32 %v241, %v226
        %v244 = vmin.f32 %v242, %v227
        %v245 = vmul.f32 %v243, %v244
        %v246 = vmul.f32 %v241, %v242
        %v247 = vadd.f32 %v246, %v229
        %v248 = vsub.f32 %v247, %v245
        %v249 = vadd.f32 %v248, 1e-06
        %v250 = vmul.f32 %v245, %v240
        %v251 = vmul.f32 %v236, %v249
        %vm252 = vcmp.gt.f32.partialorder %v250, %v251
        %v253 = vsel %vm252, 1, 0
        %v254 = vld [vmem:[%s183] sm:$0xf]
        %v255 = vsub.f32 %v254, %v225
        %v256 = vmul.f32 %v255, %v255
        %vm257 = vcmask 1043456
        %v258 = vsel %vm257, %v256, 0.0
        %v259 = vrot.slane %v258, 4
        %v260 = vadd.f32 %v258, %v259
        %v261 = vrot.slane %v260, 2
        %v262 = vadd.f32 %v260, %v261
        %v263 = vrot.slane %v262, 1
        %v264 = vadd.f32 %v262, %v263
        %vm265 = vcmp.eq.s32.totalorder %v253, 0
        %vm266 = vmand %vm230, %vm265
        %v267 = vsel %vm266, %v264, 0.0
        %v268 = vadd.f32 %v267, 0.0
        %v269 = vld [vmem:[%s183 + $0x4] sm:$0x1]
        %v270 = vsub.f32 %v269, %v228
        %v271 = vmul.f32 %v270, %v270
        %v272 = vsel %vm230, %v271, 0.0
        %v273 = vadd.f32 %v272, 0.0
        %v274 = vsel %vm231, %v271, 0.0
        %v275 = vadd.f32 %v274, 0.0
        %v276 = vld [vmem:[%s183 + $0x5] sm:$0xf]
        %v277 = vsub.f32 %v276, %v225
        %v278 = vmul.f32 %v277, %v277
        %v279 = vsel %vm257, %v278, 0.0
        %v280 = vrot.slane %v279, 4
        %v281 = vadd.f32 %v279, %v280
        %v282 = vrot.slane %v281, 2
        %v283 = vadd.f32 %v281, %v282
        %v284 = vrot.slane %v283, 1
        %v285 = vadd.f32 %v283, %v284
        %vm286 = vcmp.eq.s32.totalorder %v253, 1
        %vm287 = vmand %vm230, %vm286
        %v288 = vsel %vm287, %v285, 0.0
        %v289 = vadd.f32 %v268, %v288
        %v290 = vld [vmem:[%s183 + $0x9] sm:$0x1]
        %v291 = vsub.f32 %v290, %v228
        %v292 = vmul.f32 %v291, %v291
        %v293 = vsel %vm230, %v292, 0.0
        %v294 = vadd.f32 %v273, %v293
        %v295 = vsel %vm231, %v292, 0.0
        %v296 = vadd.f32 %v275, %v295
        %v297 = vld [vmem:[%s183 + $0xa] sm:$0xff]
        %v298 = vld [vmem:[%s183 + $0x12] sm:$0xff]
        %v299 = vld [vmem:[%s183 + $0x1a] sm:$0xf]
        %v300 = vld [vmem:[%s192 + $0xa] sm:$0xff]
        %v301 = vld [vmem:[%s192 + $0x12] sm:$0xff]
        %v302 = vld [vmem:[%s192 + $0x1a] sm:$0xf]
        %v303 = vlog2.pop %v297
        %v304 = vmul.f32 %v303, 0.6931472
        %v305 = vlog2.pop %v298
        %v306 = vmul.f32 %v305, 0.6931472
        %v307 = vlog2.pop %v299
        %v308 = vmul.f32 %v307, 0.6931472
        %v309 = vmax.f32 %v304, -100.0
        %v310 = vmax.f32 %v306, -100.0
        %v311 = vmax.f32 %v308, -100.0
        %v312 = vsub.f32 1.0, %v297
        %v313 = vsub.f32 1.0, %v298
        %v314 = vsub.f32 1.0, %v299
        %v315 = vlog2.pop %v312
        %v316 = vmul.f32 %v315, 0.6931472
        %v317 = vlog2.pop %v313
        %v318 = vmul.f32 %v317, 0.6931472
        %v319 = vlog2.pop %v314
        %v320 = vmul.f32 %v319, 0.6931472
        %v321 = vmax.f32 %v316, -100.0
        %v322 = vmax.f32 %v318, -100.0
        %v323 = vmax.f32 %v320, -100.0
        %v324 = vmul.f32 %v300, %v309
        %v325 = vmul.f32 %v301, %v310
        %v326 = vmul.f32 %v302, %v311
        %v327 = vsub.f32 1.0, %v300
        %v328 = vsub.f32 1.0, %v301
        %v329 = vsub.f32 1.0, %v302
        %v330 = vmul.f32 %v327, %v321
        %v331 = vmul.f32 %v328, %v322
        %v332 = vmul.f32 %v329, %v323
        %v333 = vadd.f32 %v324, %v330
        %v334 = vadd.f32 %v325, %v331
        %v335 = vadd.f32 %v326, %v332
        %v336 = vsub.f32 0.0, %v333
        %v337 = vsub.f32 0.0, %v334
        %v338 = vsub.f32 0.0, %v335
        %v339 = vadd.f32 %v336, %v337
        %v340 = vsel %vm257, %v338, 0.0
        %v341 = vadd.f32 %v339, %v340
        %v342 = vrot.slane %v341, 4
        %v343 = vadd.f32 %v341, %v342
        %v344 = vrot.slane %v343, 2
        %v345 = vadd.f32 %v343, %v344
        %v346 = vrot.slane %v345, 1
        %v347 = vadd.f32 %v345, %v346
        %v348 = vsel %vm230, %v347, 0.0
        %vm349 = vcmask 1040384
        %v350 = vsel %vm349, %v289, 0.0
        %351 = vadd.xlane.f32.xlu0 %v350
        %v352 = vpop.xlane.xlu0 %351
        %v353 = vrot.slane %v352, 4
        %v354 = vadd.f32 %v352, %v353
        %v355 = vrot.slane %v354, 2
        %v356 = vadd.f32 %v354, %v355
        %v357 = vrot.slane %v356, 1
        %v358 = vadd.f32 %v356, %v357
        %s359 = vtos %v358
        %v360 = vsel %vm349, %v294, 0.0
        %361 = vadd.xlane.f32.xlu0 %v360
        %v362 = vpop.xlane.xlu0 %361
        %v363 = vrot.slane %v362, 4
        %v364 = vadd.f32 %v362, %v363
        %v365 = vrot.slane %v364, 2
        %v366 = vadd.f32 %v364, %v365
        %v367 = vrot.slane %v366, 1
        %v368 = vadd.f32 %v366, %v367
        %s369 = vtos %v368
        %v370 = vsel %vm349, %v296, 0.0
        %371 = vadd.xlane.f32.xlu0 %v370
        %v372 = vpop.xlane.xlu0 %371
        %v373 = vrot.slane %v372, 4
        %v374 = vadd.f32 %v372, %v373
        %v375 = vrot.slane %v374, 2
        %v376 = vadd.f32 %v374, %v375
        %v377 = vrot.slane %v376, 1
        %v378 = vadd.f32 %v376, %v377
        %s379 = vtos %v378
        %v380 = vsel %vm349, %v348, 0.0
        %381 = vadd.xlane.f32.xlu0 %v380
        %v382 = vpop.xlane.xlu0 %381
        %v383 = vrot.slane %v382, 4
        %v384 = vadd.f32 %v382, %v383
        %v385 = vrot.slane %v384, 2
        %v386 = vadd.f32 %v384, %v385
        %v387 = vrot.slane %v386, 1
        %v388 = vadd.f32 %v386, %v387
        %s389 = vtos %v388
        %v390 = vlaneseq
        %v391 = vshrl.u32 %v390, 7
        %v392 = vlaneseq
        %v393 = vand.u32 %v392, 127
        %vm394 = vcmp.eq.s32.totalorder %v391, 0
        %vm395 = vcmp.eq.s32.totalorder %v393, 0
        %vm396 = vmand %vm394, %vm395
        %v397 = vstv %s359
        %v398 = vsel %vm396, %v397, 0.0
        %vm399 = vcmp.eq.s32.totalorder %v393, 1
        %vm400 = vmand %vm394, %vm399
        %v401 = vstv %s369
        %v402 = vsel %vm400, %v401, 0.0
        %v403 = vadd.f32 %v398, %v402
        %vm404 = vcmp.eq.s32.totalorder %v393, 2
        %vm405 = vmand %vm394, %vm404
        %v406 = vstv %s379
        %v407 = vsel %vm405, %v406, 0.0
        %v408 = vadd.f32 %v403, %v407
        %vm409 = vcmp.eq.s32.totalorder %v393, 3
        %vm410 = vmand %vm394, %vm409
        %v411 = vstv %s389
        %v412 = vsel %vm410, %v411, 0.0
        %v413 = vadd.f32 %v408, %v412
        %v414 = vld [vmem:[%s217] sm:$0xff]
        %v415 = vadd.f32 %v414, %v413
        %416 = vst [vmem:[%s217] sm:$0xff] %v415
        %s417 = sand.u32 %s98, 1
        %s418 = scalar_lea.sflag [#allocation4], %s417
        %s419 = sand.u32 %s98, 1
        %s420 = smul.addr %s419, 8
        %s421 = scalar_lea.vmem [#allocation7], %s420
        // Predicated region
        $region41: #{tpu_custom_call.1} parent=27 // pred_check
          %p422 = pneg %p108
        $region42: #{tpu_custom_call.1} parent=27 // pred_check_branch
          %424 = sbr.rel (%p422) target = $region44
        $region43: #{tpu_custom_call.1} parent=27 // pred_region
          %s426 = ssub.s32 128, 128
          %427 = vsyncadd %s418, %s426
          %s428 = smul.addr %s26, 128
          %s429 = scalar_lea.hbm %s2, %s428
          %s431 = sshll.u32 %s421, 4
          %s432 = int_to_ptr.vmem [resolvable:$true] %s431
          %434 = dma.vmem_to_hbm [thread:$0]  %s432, 128, %s429, %s418
        $region44: #{tpu_custom_call.1} parent=27 // pred_fallthru
          _
      $region28: #{tpu_custom_call.1} parent=5 // pred_fallthru
        _
      %p435 = scmp.le.s32.totalorder 2, %s17
      // Predicated region
      $region45: #{tpu_custom_call.1} parent=5 // pred_check
        %p436 = pneg %p435
      $region46: #{tpu_custom_call.1} parent=5 // pred_check_branch
        %438 = sbr.rel (%p436) target = $region48
      $region47: #{tpu_custom_call.1} parent=5 // pred_region
        %s439 = ssub.s32 %s17, 2
        // Predicated region
        $region49: #{tpu_custom_call.1} parent=47 // pred_check
          %p440 = pneg %p114
        $region50: #{tpu_custom_call.1} parent=47 // pred_check_branch
          %442 = sbr.rel (%p440) target = $region52
        $region51: #{tpu_custom_call.1} parent=47 // pred_region
          %s443 = sand.u32 %s99, 1
          %s444 = scalar_lea.sflag [#allocation4], %s443
          %s445 = sand.u32 %s99, 1
          %s446 = smul.addr %s445, 8
          %s447 = scalar_lea.vmem [#allocation7], %s446
          %448 = dma.done %s444, 128
        $region52: #{tpu_custom_call.1} parent=47 // pred_fallthru
          _
      $region48: #{tpu_custom_call.1} parent=5 // pred_fallthru
        _
    $region6: #{tpu_custom_call.1} parent=1 // loop_footer
      %s21 = sadd.s32 1, %s17
    $region7: #{tpu_custom_call.1} parent=1 // loop_footer_branch
      %16 = sbr.rel target = $region3
    $region8: #{tpu_custom_call.1} parent=1 // loop_exit
      _
    %449 = vsyncpa [#allocation3], 1
    %s450 = scalar_lea.sflag [#allocation3], 1
    %451 = vsyncpa %s450, 1
    %452 = vsyncpa [#allocation6], 1
    %s453 = scalar_lea.sflag [#allocation6], 1
    %454 = vsyncpa %s453, 1
    %455 = vsyncpa [#allocation4], 1
    %s456 = scalar_lea.sflag [#allocation4], 1
    %457 = vsyncpa %s456, 1

</llo_original>
